<compile_context>
chip_gen: v7x
topology: tpu7x:2x2x1
jax: 0.10.0
libtpu: 0.0.40
codegen_flags: <defaults>
</compile_context>

<pallas_src>
import jax
import jax.numpy as jnp
from jax.experimental import pallas as pl
from jax.experimental.pallas import tpu as pltpu


TILE_M = 2048              # target rows per grid step (f32 working set << scoped VMEM)
SMALL_FALLBACK_ELEMS = 1 << 16   # m*out_f below this -> plain JAX (launch overhead dominates)


def _round_up(x, n):
    return ((x + n - 1) // n) * n


def linear_kernel(x_ref, w_ref, b_ref, o_ref):
    # x_ref : [tile_m, K]   (tokens, in_features)    -- pipelined per grid step
    # w_ref : [K, N]        (pre-transposed weight)  -- VMEM-resident
    # b_ref : [1, N]                                  -- VMEM-resident
    # o_ref : [tile_m, N]
    acc = jnp.dot(x_ref[...], w_ref[...], preferred_element_type=jnp.float32)
    o_ref[...] = (acc + b_ref[...]).astype(o_ref.dtype)


def arbitrary_module_forward(x, weight, bias, *, use_pallas=None):
    """Forward of ArbitraryModule('torch.nn.Linear', args=[in_f, out_f]).

    x:      [batch, seq, in_features]   float32
    weight: [out_features, in_features] (PyTorch nn.Linear layout)
    bias:   [out_features]
    returns [batch, seq, out_features]
    """
    batch, seq, in_f = x.shape
    out_f = weight.shape[0]
    m = batch * seq

    # --- small-problem fallback ------------------------------------------------
    if use_pallas is None:
        use_pallas = m * out_f >= SMALL_FALLBACK_ELEMS
    if not use_pallas:
        y = x.reshape(m, in_f) @ weight.T + bias
        return y.reshape(batch, seq, out_f)

    # --- parameter prep (tiny, one-time) ----------------------------------------
    w_t = jnp.transpose(weight)          # [in_f, out_f]  canonical MXU feed
    b2d = bias.reshape(1, out_f)
    x2d = x.reshape(m, in_f)

    # --- balanced M tiling -------------------------------------------------------
    # >= 2 tiles whenever m is large so both v7x TensorCores get work; tiles are
    # balanced so the last tile wastes < 8 rows (and the x pad usually vanishes).
    if m >= TILE_M:
        n_tiles = max(2, pl.cdiv(m, TILE_M))
    else:
        n_tiles = 1
    tile_m = _round_up(pl.cdiv(m, n_tiles), 8)   # f32 sublane tiling (use 16 for bf16)
    m_pad = tile_m * n_tiles
    if m_pad != m:
        x2d = jnp.pad(x2d, ((0, m_pad - m), (0, 0)))

    cost = pl.CostEstimate(
        flops=2 * m_pad * in_f * out_f,
        transcendentals=0,
        bytes_accessed=4 * (m_pad * in_f + in_f * out_f + out_f + m_pad * out_f),
    )

    out = pl.pallas_call(
        linear_kernel,
        out_shape=jax.ShapeDtypeStruct((m_pad, out_f), x.dtype),
        grid_spec=pltpu.PrefetchScalarGridSpec(
            num_scalar_prefetch=0,
            grid=(n_tiles,),
            in_specs=[
                pl.BlockSpec((tile_m, in_f), lambda i: (i, 0)),   # x tile: pipelined
                pl.BlockSpec((in_f, out_f), lambda i: (0, 0)),    # weight: resident
                pl.BlockSpec((1, out_f), lambda i: (0, 0)),       # bias: resident
            ],
            out_specs=pl.BlockSpec((tile_m, out_f), lambda i: (i, 0)),
        ),
        compiler_params=pltpu.CompilerParams(
            dimension_semantics=("parallel",),   # independent row tiles -> megacore on v7x
        ),
        cost_estimate=cost,
    )(x2d, w_t, b2d)

    if m_pad != m:
        out = out[:m]
    return out.reshape(batch, seq, out_f)


if __name__ == "__main__":
    in_features, out_features = 32, 64

    key = jax.random.PRNGKey(0)
    kx, kw, kb, kx2 = jax.random.split(key, 4)

    # Deterministic parameter init (uniform, like PyTorch's default scale)
    bound = 1.0 / (in_features ** 0.5)
    weight = jax.random.uniform(
        kw, (out_features, in_features), minval=-bound, maxval=bound, dtype=jnp.float32
    )
    bias = jax.random.uniform(
        kb, (out_features,), minval=-bound, maxval=bound, dtype=jnp.float32
    )

    # 1) Canonical small shape (batch=2, seq=8): auto small-problem fallback path.
    x_small = jax.random.normal(kx, (2, 8, in_features), dtype=jnp.float32)
    y_small = arbitrary_module_forward(x_small, weight, bias)
    jax.block_until_ready(y_small)
    ref_small = x_small @ weight.T + bias
    assert y_small.shape == (2, 8, out_features)
    assert jnp.allclose(y_small, ref_small, atol=1e-5, rtol=1e-5)

    # 2) Larger shape forced through the Pallas path (exercises grid > 1 pipelining
    #    and the balanced-tile logic).
    x_big = jax.random.normal(kx2, (2, 1024, in_features), dtype=jnp.float32)
    y_big = arbitrary_module_forward(x_big, weight, bias, use_pallas=True)
    jax.block_until_ready(y_big)
    ref_big = x_big @ weight.T + bias
    assert y_big.shape == (2, 1024, out_features)
    assert jnp.allclose(y_big, ref_big, atol=1e-4, rtol=1e-4)

    print("KERNEL_OK")
</pallas_src>

<mosaic_0001>
module attributes {stable_mosaic.version = 11 : i64} {
  func.func @linear_kernel(%arg0: i32, %arg1: memref<1024x32xf32, #tpu.memory_space<vmem>>, %arg2: memref<32x64xf32, #tpu.memory_space<vmem>>, %arg3: memref<1x64xf32, #tpu.memory_space<vmem>>, %arg4: memref<1024x64xf32, #tpu.memory_space<vmem>>) attributes {dimension_semantics = [#tpu.dimension_semantics<parallel>], iteration_bounds = array<i64: 2>, scalar_prefetch = 0 : i64, scratch_operands = 0 : i64, tpu.core_type = #tpu.core_type<tc>, window_params = [{transform_indices = @transform_0, window_bounds = array<i64: 1024, 32>}, {pipeline_mode = #tpu.pipeline_mode<synchronous>, transform_indices = @transform_1, window_bounds = array<i64: 32, 64>}, {pipeline_mode = #tpu.pipeline_mode<synchronous>, transform_indices = @transform_2, window_bounds = array<i64: 1, 64>}, {transform_indices = @transform_3, window_bounds = array<i64: 1024, 64>}]} {
    %c0 = arith.constant 0 : index
    %c0_0 = arith.constant 0 : index
    %0 = vector.load %arg1[%c0, %c0_0] : memref<1024x32xf32, #tpu.memory_space<vmem>>, vector<1024x32xf32>
    %c0_1 = arith.constant 0 : index
    %c0_2 = arith.constant 0 : index
    %1 = vector.load %arg2[%c0_1, %c0_2] : memref<32x64xf32, #tpu.memory_space<vmem>>, vector<32x64xf32>
    %cst = arith.constant dense<0.000000e+00> : vector<1024x64xf32>
    %2 = tpu.matmul %0, %1, %cst {dimension_numbers = #tpu.dot_dimension_numbers<[1], [0], [0], [1], [0, 0, 1, 1], [], []>} : vector<1024x32xf32>, vector<32x64xf32>, vector<1024x64xf32> -> vector<1024x64xf32>
    %c0_3 = arith.constant 0 : index
    %c0_4 = arith.constant 0 : index
    %3 = vector.load %arg3[%c0_3, %c0_4] : memref<1x64xf32, #tpu.memory_space<vmem>>, vector<1x64xf32>
    %4 = vector.broadcast %3 : vector<1x64xf32> to vector<1024x64xf32>
    %5 = arith.addf %2, %4 : vector<1024x64xf32>
    %c0_5 = arith.constant 0 : index
    %c0_6 = arith.constant 0 : index
    %6 = vector.load %arg4[%c0_5, %c0_6] : memref<1024x64xf32, #tpu.memory_space<vmem>>, vector<1024x64xf32>
    tpu.vector_store %arg4[%c0_5, %c0_6], %5 {strides = array<i32>} : memref<1024x64xf32, #tpu.memory_space<vmem>>, vector<1024x64xf32>,
    return
  }
  func.func @transform_0(%arg0: i32) -> (i32, i32) {
    %c0_i32 = arith.constant 0 : i32
    %c0_i32_0 = arith.constant 0 : i32
    return %arg0, %c0_i32 : i32, i32
  }
  func.func @transform_1(%arg0: i32) -> (i32, i32) {
    %c0_i32 = arith.constant 0 : i32
    %c0_i32_0 = arith.constant 0 : i32
    %c0_i32_1 = arith.constant 0 : i32
    return %c0_i32, %c0_i32_0 : i32, i32
  }
  func.func @transform_2(%arg0: i32) -> (i32, i32) {
    %c0_i32 = arith.constant 0 : i32
    %c0_i32_0 = arith.constant 0 : i32
    %c0_i32_1 = arith.constant 0 : i32
    return %c0_i32, %c0_i32_0 : i32, i32
  }
  func.func @transform_3(%arg0: i32) -> (i32, i32) {
    %c0_i32 = arith.constant 0 : i32
    %c0_i32_0 = arith.constant 0 : i32
    return %arg0, %c0_i32 : i32, i32
  }
}

</mosaic_0001>

<llo_original>
// kernel: tpu_custom_call.1
$region0: #{tpu_custom_call.1}
  #allocation0 [shape = 'u32[]', space=smem, size = 0x4, offset = 0x4, fixed_abs, tag = 'smem constant byte address 0x4 - core index']
  #allocation1 [shape = 'u32[144,128]{1,0:T(1,128)}', space=vmem, size = 0x12000, scoped, tag = 'internal scratch']
  %s0 = inlined_call_operand.vmem [shape: f32[2048,32], index: 0, kind: input, shape index: {}]
  %s1 = inlined_call_operand.vmem [shape: f32[32,64], index: 1, kind: input, shape index: {}]
  %s2 = inlined_call_operand.vmem [shape: f32[1,64], index: 2, kind: input, shape index: {}]
  %s3 = inlined_call_operand.vmem [shape: f32[2048,64], index: 3, kind: output, shape index: {}]
  %s4 = sld [smem:[#allocation0]]
  $region45: #{tpu_custom_call.1} parent=0
    _
  %s6 = ssub.s32 1, %s4
  %s7 = scalar_select 0, %s6, %s4
  loop: start=0, step=1, limit=4
  $region2: #{tpu_custom_call.1} parent=0 // loop_pre_header
    _
  $region3: #{tpu_custom_call.1} parent=0 // loop_header
    %s9 = sphi 0, %s13
    %p10 = scmp.ge.s32.totalorder %s9, 4
    %s19 = sphi 0, %s21
    %s22 = sphi 0, %s19
    %s23 = sphi 0, %s22
    %s39 = sphi 0, %s23
    %s43 = sphi 0, %s43
    %s45 = sphi 0, %s43
    %s46 = sphi 0, %s45
    %s60 = sphi 0, %s46
    %s64 = sphi 0, %s64
    %s66 = sphi 0, %s64
    %s67 = sphi 0, %s66
    %s81 = sphi 0, %s67
    %s87 = sphi 0, %s89
    %s90 = sphi 0, %s87
    %s91 = sphi 0, %s90
    %s107 = sphi 0, %s91
  $region4: #{tpu_custom_call.1} parent=0 // loop_header_branch
    %12 = sbr.rel (%p10) target = $region8
  $region5: #{tpu_custom_call.1} parent=0 // loop_body
    %s14 = ssub.s32 %s9, 1
    %s15 = ssub.s32 %s9, 2
    %s16 = sadd.s32 %s9, 1
    %s17 = ssub.s32 %s9, %s16
    %p18 = scmp.eq.s32.totalorder %s17, 0
    %s20 = sadd.s32 %s19, 1
    %s21 = scalar_select %p18, %s19, %s20
    %p24 = pneg %p18
    %p25 = scmp.eq.s32.totalorder %s9, 1
    %p26 = por %p24, %p25
    %p27 = scmp.ne.s32.totalorder %s19, %s22
    %p28 = scmp.eq.s32.totalorder %s9, 0
    %p29 = por %p27, %p28
    %p30 = scmp.ne.s32.totalorder %s19, %s22
    %p31 = scmp.eq.s32.totalorder %s14, 1
    %p32 = por %p30, %p31
    %p33 = scmp.ne.s32.totalorder %s22, %s23
    %p34 = scmp.eq.s32.totalorder %s14, 0
    %p35 = por %p33, %p34
    %p36 = scmp.ne.s32.totalorder %s22, %s23
    %p37 = scmp.eq.s32.totalorder %s15, 1
    %p38 = por %p36, %p37
    %p40 = scmp.ne.s32.totalorder %s23, %s39
    %p41 = scmp.eq.s32.totalorder %s15, 0
    %p42 = por %p40, %p41
    %s44 = sadd.s32 %s43, 1
    %p47 = scmp.eq.s32.totalorder %s9, 1
    %p48 = scmp.ne.s32.totalorder %s43, %s45
    %p49 = scmp.eq.s32.totalorder %s9, 0
    %p50 = por %p48, %p49
    %p51 = scmp.ne.s32.totalorder %s43, %s45
    %p52 = scmp.eq.s32.totalorder %s14, 1
    %p53 = por %p51, %p52
    %p54 = scmp.ne.s32.totalorder %s45, %s46
    %p55 = scmp.eq.s32.totalorder %s14, 0
    %p56 = por %p54, %p55
    %p57 = scmp.ne.s32.totalorder %s45, %s46
    %p58 = scmp.eq.s32.totalorder %s15, 1
    %p59 = por %p57, %p58
    %p61 = scmp.ne.s32.totalorder %s46, %s60
    %p62 = scmp.eq.s32.totalorder %s15, 0
    %p63 = por %p61, %p62
    %s65 = sadd.s32 %s64, 1
    %p68 = scmp.eq.s32.totalorder %s9, 1
    %p69 = scmp.ne.s32.totalorder %s64, %s66
    %p70 = scmp.eq.s32.totalorder %s9, 0
    %p71 = por %p69, %p70
    %p72 = scmp.ne.s32.totalorder %s64, %s66
    %p73 = scmp.eq.s32.totalorder %s14, 1
    %p74 = por %p72, %p73
    %p75 = scmp.ne.s32.totalorder %s66, %s67
    %p76 = scmp.eq.s32.totalorder %s14, 0
    %p77 = por %p75, %p76
    %p78 = scmp.ne.s32.totalorder %s66, %s67
    %p79 = scmp.eq.s32.totalorder %s15, 1
    %p80 = por %p78, %p79
    %p82 = scmp.ne.s32.totalorder %s67, %s81
    %p83 = scmp.eq.s32.totalorder %s15, 0
    %p84 = por %p82, %p83
    %s85 = ssub.s32 %s9, %s16
    %p86 = scmp.eq.s32.totalorder %s85, 0
    %s88 = sadd.s32 %s87, 1
    %s89 = scalar_select %p86, %s87, %s88
    %p92 = pneg %p86
    %p93 = scmp.eq.s32.totalorder %s9, 1
    %p94 = por %p92, %p93
    %p95 = scmp.ne.s32.totalorder %s87, %s90
    %p96 = scmp.eq.s32.totalorder %s9, 0
    %p97 = por %p95, %p96
    %p98 = scmp.ne.s32.totalorder %s87, %s90
    %p99 = scmp.eq.s32.totalorder %s14, 1
    %p100 = por %p98, %p99
    %p101 = scmp.ne.s32.totalorder %s90, %s91
    %p102 = scmp.eq.s32.totalorder %s14, 0
    %p103 = por %p101, %p102
    %p104 = scmp.ne.s32.totalorder %s90, %s91
    %p105 = scmp.eq.s32.totalorder %s15, 1
    %p106 = por %p104, %p105
    %p108 = scmp.ne.s32.totalorder %s91, %s107
    %p109 = scmp.eq.s32.totalorder %s15, 0
    %p110 = por %p108, %p109
    %p111 = scmp.le.s32.totalorder 1, %s9
    %p112 = scmp.lt.s32.totalorder %s9, 3
    %p113 = pnand %p111, %p112
    %p114 = pneg %p113
    // Predicated region
    $region9: #{tpu_custom_call.1} parent=5 // pred_check
      _
    $region10: #{tpu_custom_call.1} parent=5 // pred_check_branch
      %116 = sbr.rel (%p113) target = $region12
    $region11: #{tpu_custom_call.1} parent=5 // pred_region
      %s117 = ssub.s32 %s9, 1
      // Predicated region
      $region13: #{tpu_custom_call.1} parent=11 // pred_check
        %p118 = pneg %p56
      $region14: #{tpu_custom_call.1} parent=11 // pred_check_branch
        %120 = sbr.rel (%p118) target = $region16
      $region15: #{tpu_custom_call.1} parent=11 // pred_region
        _
      $region16: #{tpu_custom_call.1} parent=11 // pred_fallthru
        _
      // Predicated region
      $region17: #{tpu_custom_call.1} parent=11 // pred_check
        %p121 = pneg %p77
      $region18: #{tpu_custom_call.1} parent=11 // pred_check_branch
        %123 = sbr.rel (%p121) target = $region20
      $region19: #{tpu_custom_call.1} parent=11 // pred_region
        _
      $region20: #{tpu_custom_call.1} parent=11 // pred_fallthru
        _
    $region12: #{tpu_custom_call.1} parent=5 // pred_fallthru
      _
    %p124 = scmp.lt.s32.totalorder %s9, 2
    // Predicated region
    $region21: #{tpu_custom_call.1} parent=5 // pred_check
      %p125 = pneg %p124
    $region22: #{tpu_custom_call.1} parent=5 // pred_check_branch
      %127 = sbr.rel (%p125) target = $region24
    $region23: #{tpu_custom_call.1} parent=5 // pred_region
      // Predicated region
      $region25: #{tpu_custom_call.1} parent=23 // pred_check
        %p128 = pneg %p29
      $region26: #{tpu_custom_call.1} parent=23 // pred_check_branch
        %130 = sbr.rel (%p128) target = $region28
      $region27: #{tpu_custom_call.1} parent=23 // pred_region
        %s131 = smul.u32 128, %s9
        %p132 = scmp.lt.s32.totalorder %s131, 255
        %s133 = scalar_select %p132, %s131, 255
        %s134 = smul.addr %s133, 8
        %s135 = scalar_lea.vmem %s0, %s134
        %s136 = smul.u32 128, %s9
      $region28: #{tpu_custom_call.1} parent=23 // pred_fallthru
        _
    $region24: #{tpu_custom_call.1} parent=5 // pred_fallthru
      _
    %p137 = scmp.le.s32.totalorder 1, %s9
    %p138 = scmp.lt.s32.totalorder %s9, 3
    %p139 = pnand %p137, %p138
    %p140 = pneg %p139
    // Predicated region
    $region29: #{tpu_custom_call.1} parent=5 // pred_check
      _
    $region30: #{tpu_custom_call.1} parent=5 // pred_check_branch
      %142 = sbr.rel (%p139) target = $region32
    $region31: #{tpu_custom_call.1} parent=5 // pred_region
      %s143 = ssub.s32 %s9, 1
      %s144 = smul.u32 128, %s14
      %p145 = scmp.lt.s32.totalorder %s144, 255
      %s146 = scalar_select %p145, %s144, 255
      %s147 = smul.addr %s146, 8
      %s148 = scalar_lea.vmem %s0, %s147
      %p149 = pneg %p35
      %p150 = pneg %p32
      %p151 = pneg %p56
      %p152 = pneg %p53
      %p153 = pneg %p77
      %p154 = pneg %p74
      %p155 = pneg %p103
      %p156 = pneg %p100
      %s157 = smul.u32 128, %s14
      %p158 = scmp.lt.s32.totalorder %s157, 255
      %s159 = scalar_select %p158, %s157, 255
      %s160 = smul.addr %s159, 8
      %s161 = scalar_lea.vmem %s3, %s160
      %s162 = smul.u32 128, %s14
      %p163 = scmp.lt.s32.totalorder %s162, 255
      %s164 = scalar_select %p163, %s162, 255
      %s165 = smul.addr %s164, 8
      %s166 = scalar_lea.vmem %s0, %s165
      %s167 = smul.u32 128, %s14
      %s168 = smul.u32 128, %s14
      %p169 = scmp.lt.s32.totalorder %s168, 255
      %s170 = scalar_select %p169, %s168, 255
      %s171 = smul.addr %s170, 8
      %s172 = scalar_lea.vmem %s3, %s171
      %s173 = smul.u32 128, %s14
      %v174 = vld [vmem:[%s166] sm:$0xff]
      %v175 = vld [vmem:[%s166 + $0x8] sm:$0xff]
      %v176 = vld [vmem:[%s166 + $0x10] sm:$0xff]
      %v177 = vld [vmem:[%s166 + $0x18] sm:$0xff]
      %v178 = vld [vmem:[%s166 + $0x20] sm:$0xff]
      %v179 = vld [vmem:[%s166 + $0x28] sm:$0xff]
      %v180 = vld [vmem:[%s166 + $0x30] sm:$0xff]
      %v181 = vld [vmem:[%s166 + $0x38] sm:$0xff]
      %v182 = vld [vmem:[%s166 + $0x40] sm:$0xff]
      %v183 = vld [vmem:[%s166 + $0x48] sm:$0xff]
      %v184 = vld [vmem:[%s166 + $0x50] sm:$0xff]
      %v185 = vld [vmem:[%s166 + $0x58] sm:$0xff]
      %v186 = vld [vmem:[%s166 + $0x60] sm:$0xff]
      %v187 = vld [vmem:[%s166 + $0x68] sm:$0xff]
      %v188 = vld [vmem:[%s166 + $0x70] sm:$0xff]
      %v189 = vld [vmem:[%s166 + $0x78] sm:$0xff]
      %v190 = vld [vmem:[%s166 + $0x80] sm:$0xff]
      %v191 = vld [vmem:[%s166 + $0x88] sm:$0xff]
      %v192 = vld [vmem:[%s166 + $0x90] sm:$0xff]
      %v193 = vld [vmem:[%s166 + $0x98] sm:$0xff]
      %v194 = vld [vmem:[%s166 + $0xa0] sm:$0xff]
      %v195 = vld [vmem:[%s166 + $0xa8] sm:$0xff]
      %v196 = vld [vmem:[%s166 + $0xb0] sm:$0xff]
      %v197 = vld [vmem:[%s166 + $0xb8] sm:$0xff]
      %v198 = vld [vmem:[%s166 + $0xc0] sm:$0xff]
      %v199 = vld [vmem:[%s166 + $0xc8] sm:$0xff]
      %v200 = vld [vmem:[%s166 + $0xd0] sm:$0xff]
      %v201 = vld [vmem:[%s166 + $0xd8] sm:$0xff]
      %v202 = vld [vmem:[%s166 + $0xe0] sm:$0xff]
      %v203 = vld [vmem:[%s166 + $0xe8] sm:$0xff]
      %v204 = vld [vmem:[%s166 + $0xf0] sm:$0xff]
      %v205 = vld [vmem:[%s166 + $0xf8] sm:$0xff]
      %v206 = vld [vmem:[%s166 + $0x100] sm:$0xff]
      %v207 = vld [vmem:[%s166 + $0x108] sm:$0xff]
      %v208 = vld [vmem:[%s166 + $0x110] sm:$0xff]
      %v209 = vld [vmem:[%s166 + $0x118] sm:$0xff]
      %v210 = vld [vmem:[%s166 + $0x120] sm:$0xff]
      %v211 = vld [vmem:[%s166 + $0x128] sm:$0xff]
      %v212 = vld [vmem:[%s166 + $0x130] sm:$0xff]
      %v213 = vld [vmem:[%s166 + $0x138] sm:$0xff]
      %v214 = vld [vmem:[%s166 + $0x140] sm:$0xff]
      %v215 = vld [vmem:[%s166 + $0x148] sm:$0xff]
      %v216 = vld [vmem:[%s166 + $0x150] sm:$0xff]
      %v217 = vld [vmem:[%s166 + $0x158] sm:$0xff]
      %v218 = vld [vmem:[%s166 + $0x160] sm:$0xff]
      %v219 = vld [vmem:[%s166 + $0x168] sm:$0xff]
      %v220 = vld [vmem:[%s166 + $0x170] sm:$0xff]
      %v221 = vld [vmem:[%s166 + $0x178] sm:$0xff]
      %v222 = vld [vmem:[%s166 + $0x180] sm:$0xff]
      %v223 = vld [vmem:[%s166 + $0x188] sm:$0xff]
      %v224 = vld [vmem:[%s166 + $0x190] sm:$0xff]
      %v225 = vld [vmem:[%s166 + $0x198] sm:$0xff]
      %v226 = vld [vmem:[%s166 + $0x1a0] sm:$0xff]
      %v227 = vld [vmem:[%s166 + $0x1a8] sm:$0xff]
      %v228 = vld [vmem:[%s166 + $0x1b0] sm:$0xff]
      %v229 = vld [vmem:[%s166 + $0x1b8] sm:$0xff]
      %v230 = vld [vmem:[%s166 + $0x1c0] sm:$0xff]
      %v231 = vld [vmem:[%s166 + $0x1c8] sm:$0xff]
      %v232 = vld [vmem:[%s166 + $0x1d0] sm:$0xff]
      %v233 = vld [vmem:[%s166 + $0x1d8] sm:$0xff]
      %v234 = vld [vmem:[%s166 + $0x1e0] sm:$0xff]
      %v235 = vld [vmem:[%s166 + $0x1e8] sm:$0xff]
      %v236 = vld [vmem:[%s166 + $0x1f0] sm:$0xff]
      %v237 = vld [vmem:[%s166 + $0x1f8] sm:$0xff]
      %v238 = vld [vmem:[%s166 + $0x200] sm:$0xff]
      %v239 = vld [vmem:[%s166 + $0x208] sm:$0xff]
      %v240 = vld [vmem:[%s166 + $0x210] sm:$0xff]
      %v241 = vld [vmem:[%s166 + $0x218] sm:$0xff]
      %v242 = vld [vmem:[%s166 + $0x220] sm:$0xff]
      %v243 = vld [vmem:[%s166 + $0x228] sm:$0xff]
      %v244 = vld [vmem:[%s166 + $0x230] sm:$0xff]
      %v245 = vld [vmem:[%s166 + $0x238] sm:$0xff]
      %v246 = vld [vmem:[%s166 + $0x240] sm:$0xff]
      %v247 = vld [vmem:[%s166 + $0x248] sm:$0xff]
      %v248 = vld [vmem:[%s166 + $0x250] sm:$0xff]
      %v249 = vld [vmem:[%s166 + $0x258] sm:$0xff]
      %v250 = vld [vmem:[%s166 + $0x260] sm:$0xff]
      %v251 = vld [vmem:[%s166 + $0x268] sm:$0xff]
      %v252 = vld [vmem:[%s166 + $0x270] sm:$0xff]
      %v253 = vld [vmem:[%s166 + $0x278] sm:$0xff]
      %v254 = vld [vmem:[%s166 + $0x280] sm:$0xff]
      %v255 = vld [vmem:[%s166 + $0x288] sm:$0xff]
      %v256 = vld [vmem:[%s166 + $0x290] sm:$0xff]
      %v257 = vld [vmem:[%s166 + $0x298] sm:$0xff]
      %v258 = vld [vmem:[%s166 + $0x2a0] sm:$0xff]
      %v259 = vld [vmem:[%s166 + $0x2a8] sm:$0xff]
      %v260 = vld [vmem:[%s166 + $0x2b0] sm:$0xff]
      %v261 = vld [vmem:[%s166 + $0x2b8] sm:$0xff]
      %v262 = vld [vmem:[%s166 + $0x2c0] sm:$0xff]
      %v263 = vld [vmem:[%s166 + $0x2c8] sm:$0xff]
      %v264 = vld [vmem:[%s166 + $0x2d0] sm:$0xff]
      %v265 = vld [vmem:[%s166 + $0x2d8] sm:$0xff]
      %v266 = vld [vmem:[%s166 + $0x2e0] sm:$0xff]
      %v267 = vld [vmem:[%s166 + $0x2e8] sm:$0xff]
      %v268 = vld [vmem:[%s166 + $0x2f0] sm:$0xff]
      %v269 = vld [vmem:[%s166 + $0x2f8] sm:$0xff]
      %v270 = vld [vmem:[%s166 + $0x300] sm:$0xff]
      %v271 = vld [vmem:[%s166 + $0x308] sm:$0xff]
      %v272 = vld [vmem:[%s166 + $0x310] sm:$0xff]
      %v273 = vld [vmem:[%s166 + $0x318] sm:$0xff]
      %v274 = vld [vmem:[%s166 + $0x320] sm:$0xff]
      %v275 = vld [vmem:[%s166 + $0x328] sm:$0xff]
      %v276 = vld [vmem:[%s166 + $0x330] sm:$0xff]
      %v277 = vld [vmem:[%s166 + $0x338] sm:$0xff]
      %v278 = vld [vmem:[%s166 + $0x340] sm:$0xff]
      %v279 = vld [vmem:[%s166 + $0x348] sm:$0xff]
      %v280 = vld [vmem:[%s166 + $0x350] sm:$0xff]
      %v281 = vld [vmem:[%s166 + $0x358] sm:$0xff]
      %v282 = vld [vmem:[%s166 + $0x360] sm:$0xff]
      %v283 = vld [vmem:[%s166 + $0x368] sm:$0xff]
      %v284 = vld [vmem:[%s166 + $0x370] sm:$0xff]
      %v285 = vld [vmem:[%s166 + $0x378] sm:$0xff]
      %v286 = vld [vmem:[%s166 + $0x380] sm:$0xff]
      %v287 = vld [vmem:[%s166 + $0x388] sm:$0xff]
      %v288 = vld [vmem:[%s166 + $0x390] sm:$0xff]
      %v289 = vld [vmem:[%s166 + $0x398] sm:$0xff]
      %v290 = vld [vmem:[%s166 + $0x3a0] sm:$0xff]
      %v291 = vld [vmem:[%s166 + $0x3a8] sm:$0xff]
      %v292 = vld [vmem:[%s166 + $0x3b0] sm:$0xff]
      %v293 = vld [vmem:[%s166 + $0x3b8] sm:$0xff]
      %v294 = vld [vmem:[%s166 + $0x3c0] sm:$0xff]
      %v295 = vld [vmem:[%s166 + $0x3c8] sm:$0xff]
      %v296 = vld [vmem:[%s166 + $0x3d0] sm:$0xff]
      %v297 = vld [vmem:[%s166 + $0x3d8] sm:$0xff]
      %v298 = vld [vmem:[%s166 + $0x3e0] sm:$0xff]
      %v299 = vld [vmem:[%s166 + $0x3e8] sm:$0xff]
      %v300 = vld [vmem:[%s166 + $0x3f0] sm:$0xff]
      %v301 = vld [vmem:[%s166 + $0x3f8] sm:$0xff]
      %v302 = vld [vmem:[%s1] sm:$0xff]
      %v303 = vld [vmem:[%s1 + $0x8] sm:$0xff]
      %v304 = vld [vmem:[%s1 + $0x10] sm:$0xff]
      %v305 = vld [vmem:[%s1 + $0x18] sm:$0xff]
      %v306 = vld [vmem:[%s2] sm:$0x1]
      %v308 = vlaneseq
      %v309 = vshrl.u32 %v308, 7
      %v310 = vsub.s32 0, %v309
      %v311 = vrot.slane %v306, %v310
      %vm313 = vcmask 261120
      %v315 = vsel %vm313, %v174, 0
      %v318 = vsel %vm313, %v175, 0
      %v321 = vsel %vm313, %v176, 0
      %v324 = vsel %vm313, %v177, 0
      %v327 = vsel %vm313, %v178, 0
      %v330 = vsel %vm313, %v179, 0
      %v333 = vsel %vm313, %v180, 0
      %v336 = vsel %vm313, %v181, 0
      %v339 = vsel %vm313, %v182, 0
      %v342 = vsel %vm313, %v183, 0
      %v345 = vsel %vm313, %v184, 0
      %v348 = vsel %vm313, %v185, 0
      %v351 = vsel %vm313, %v186, 0
      %v354 = vsel %vm313, %v187, 0
      %v357 = vsel %vm313, %v188, 0
      %v360 = vsel %vm313, %v189, 0
      %v363 = vsel %vm313, %v190, 0
      %v366 = vsel %vm313, %v191, 0
      %v369 = vsel %vm313, %v192, 0
      %v372 = vsel %vm313, %v193, 0
      %v375 = vsel %vm313, %v194, 0
      %v378 = vsel %vm313, %v195, 0
      %v381 = vsel %vm313, %v196, 0
      %v384 = vsel %vm313, %v197, 0
      %v387 = vsel %vm313, %v198, 0
      %v390 = vsel %vm313, %v199, 0
      %v393 = vsel %vm313, %v200, 0
      %v396 = vsel %vm313, %v201, 0
      %v399 = vsel %vm313, %v202, 0
      %v402 = vsel %vm313, %v203, 0
      %v405 = vsel %vm313, %v204, 0
      %v408 = vsel %vm313, %v205, 0
      %v411 = vsel %vm313, %v206, 0
      %v414 = vsel %vm313, %v207, 0
      %v417 = vsel %vm313, %v208, 0
      %v420 = vsel %vm313, %v209, 0
      %v423 = vsel %vm313, %v210, 0
      %v426 = vsel %vm313, %v211, 0
      %v429 = vsel %vm313, %v212, 0
      %v432 = vsel %vm313, %v213, 0
      %v435 = vsel %vm313, %v214, 0
      %v438 = vsel %vm313, %v215, 0
      %v441 = vsel %vm313, %v216, 0
      %v444 = vsel %vm313, %v217, 0
      %v447 = vsel %vm313, %v218, 0
      %v450 = vsel %vm313, %v219, 0
      %v453 = vsel %vm313, %v220, 0
      %v456 = vsel %vm313, %v221, 0
      %v459 = vsel %vm313, %v222, 0
      %v462 = vsel %vm313, %v223, 0
      %v465 = vsel %vm313, %v224, 0
      %v468 = vsel %vm313, %v225, 0
      %v471 = vsel %vm313, %v226, 0
      %v474 = vsel %vm313, %v227, 0
      %v477 = vsel %vm313, %v228, 0
      %v480 = vsel %vm313, %v229, 0
      %v483 = vsel %vm313, %v230, 0
      %v486 = vsel %vm313, %v231, 0
      %v489 = vsel %vm313, %v232, 0
      %v492 = vsel %vm313, %v233, 0
      %v495 = vsel %vm313, %v234, 0
      %v498 = vsel %vm313, %v235, 0
      %v501 = vsel %vm313, %v236, 0
      %v504 = vsel %vm313, %v237, 0
      %v507 = vsel %vm313, %v238, 0
      %v510 = vsel %vm313, %v239, 0
      %v513 = vsel %vm313, %v240, 0
      %v516 = vsel %vm313, %v241, 0
      %v519 = vsel %vm313, %v242, 0
      %v522 = vsel %vm313, %v243, 0
      %v525 = vsel %vm313, %v244, 0
      %v528 = vsel %vm313, %v245, 0
      %v531 = vsel %vm313, %v246, 0
      %v534 = vsel %vm313, %v247, 0
      %v537 = vsel %vm313, %v248, 0
      %v540 = vsel %vm313, %v249, 0
      %v543 = vsel %vm313, %v250, 0
      %v546 = vsel %vm313, %v251, 0
      %v549 = vsel %vm313, %v252, 0
      %v552 = vsel %vm313, %v253, 0
      %v555 = vsel %vm313, %v254, 0
      %v558 = vsel %vm313, %v255, 0
      %v561 = vsel %vm313, %v256, 0
      %v564 = vsel %vm313, %v257, 0
      %v567 = vsel %vm313, %v258, 0
      %v570 = vsel %vm313, %v259, 0
      %v573 = vsel %vm313, %v260, 0
      %v576 = vsel %vm313, %v261, 0
      %v579 = vsel %vm313, %v262, 0
      %v582 = vsel %vm313, %v263, 0
      %v585 = vsel %vm313, %v264, 0
      %v588 = vsel %vm313, %v265, 0
      %v591 = vsel %vm313, %v266, 0
      %v594 = vsel %vm313, %v267, 0
      %v597 = vsel %vm313, %v268, 0
      %v600 = vsel %vm313, %v269, 0
      %v603 = vsel %vm313, %v270, 0
      %v606 = vsel %vm313, %v271, 0
      %v609 = vsel %vm313, %v272, 0
      %v612 = vsel %vm313, %v273, 0
      %v615 = vsel %vm313, %v274, 0
      %v618 = vsel %vm313, %v275, 0
      %v621 = vsel %vm313, %v276, 0
      %v624 = vsel %vm313, %v277, 0
      %v627 = vsel %vm313, %v278, 0
      %v630 = vsel %vm313, %v279, 0
      %v633 = vsel %vm313, %v280, 0
      %v636 = vsel %vm313, %v281, 0
      %v639 = vsel %vm313, %v282, 0
      %v642 = vsel %vm313, %v283, 0
      %v645 = vsel %vm313, %v284, 0
      %v648 = vsel %vm313, %v285, 0
      %v651 = vsel %vm313, %v286, 0
      %v654 = vsel %vm313, %v287, 0
      %v657 = vsel %vm313, %v288, 0
      %v660 = vsel %vm313, %v289, 0
      %v663 = vsel %vm313, %v290, 0
      %v666 = vsel %vm313, %v291, 0
      %v669 = vsel %vm313, %v292, 0
      %v672 = vsel %vm313, %v293, 0
      %v675 = vsel %vm313, %v294, 0
      %v678 = vsel %vm313, %v295, 0
      %v681 = vsel %vm313, %v296, 0
      %v684 = vsel %vm313, %v297, 0
      %v687 = vsel %vm313, %v298, 0
      %v690 = vsel %vm313, %v299, 0
      %v693 = vsel %vm313, %v300, 0
      %v696 = vsel %vm313, %v301, 0
      %698 = vmatprep.subr.mxu0 0.0
      %699 = vmatpush1.msra.mxu0 %v302
      %700 = vmatprep.subr.mxu0 0.0
      %701 = vmatpush1.msra.mxu0 %v303
      %702 = vmatprep.subr.mxu0 0.0
      %703 = vmatpush1.msra.mxu0 %v304
      %704 = vmatprep.subr.mxu0 0.0
      %705 = vmatpush1.msra.mxu0 %v305
      %706 = vmatprep.subr.mxu0 0.0
      %707 = vmatpush1.msra.mxu0 0.0
      %708 = vmatprep.subr.mxu0 0.0
      %709 = vmatpush1.msra.mxu0 0.0
      %710 = vmatprep.subr.mxu0 0.0
      %711 = vmatpush1.msra.mxu0 0.0
      %712 = vmatprep.subr.mxu0 0.0
      %713 = vmatpush1.msra.mxu0 0.0
      %714 = vmatprep.subr.mxu0 0.0
      %715 = vmatpush1.msra.mxu0 0.0
      %716 = vmatprep.subr.mxu0 0.0
      %717 = vmatpush1.msra.mxu0 0.0
      %718 = vmatprep.subr.mxu0 0.0
      %719 = vmatpush1.msra.mxu0 0.0
      %720 = vmatprep.subr.mxu0 0.0
      %721 = vmatpush1.msra.mxu0 0.0
      %722 = vmatprep.subr.mxu0 0.0
      %723 = vmatpush1.msra.mxu0 0.0
      %724 = vmatprep.subr.mxu0 0.0
      %725 = vmatpush1.msra.mxu0 0.0
      %726 = vmatprep.subr.mxu0 0.0
      %727 = vmatpush1.msra.mxu0 0.0
      %728 = vmatprep.subr.mxu0 0.0
      %729 = vmatpush1.msra.mxu0 0.0
      %730 = vmatprep.subr.mxu0 0.0
      %731 = vmatpush1.msra.mxu0 0.0
      %732 = vmatprep.subr.mxu0 0.0
      %733 = vmatpush1.msra.mxu0 0.0
      %734 = vmatprep.subr.mxu0 0.0
      %735 = vmatpush1.msra.mxu0 0.0
      %736 = vmatprep.subr.mxu0 0.0
      %737 = vmatpush1.msra.mxu0 0.0
      %738 = vmatprep.subr.mxu0 0.0
      %739 = vmatpush1.msra.mxu0 0.0
      %740 = vmatprep.subr.mxu0 0.0
      %741 = vmatpush1.msra.mxu0 0.0
      %742 = vmatprep.subr.mxu0 0.0
      %743 = vmatpush1.msra.mxu0 0.0
      %744 = vmatprep.subr.mxu0 0.0
      %745 = vmatpush1.msra.mxu0 0.0
      %746 = vmatprep.subr.mxu0 0.0
      %747 = vmatpush1.msra.mxu0 0.0
      %748 = vmatprep.subr.mxu0 0.0
      %749 = vmatpush1.msra.mxu0 0.0
      %750 = vmatprep.subr.mxu0 0.0
      %751 = vmatpush1.msra.mxu0 0.0
      %752 = vmatprep.subr.mxu0 0.0
      %753 = vmatpush1.msra.mxu0 0.0
      %754 = vmatprep.subr.mxu0 0.0
      %755 = vmatpush1.msra.mxu0 0.0
      %756 = vmatprep.subr.mxu0 0.0
      %757 = vmatpush1.msra.mxu0 0.0
      %758 = vmatprep.subr.mxu0 0.0
      %759 = vmatpush1.msra.mxu0 0.0
      %760 = vmatprep.subr.mxu0 0.0
      %761 = vmatpush1.msra.mxu0 0.0
      %762 = vmatprep.mubr.f32.mxu0 0.0
      %763 = vmatmul.mubr.f32.gmra.mrb[0].mxu0 %v315
      %v764 = vpop.f32.mrb[0].mxu0
      %v765 = vadd.f32 %v311, %v764
      %v766 = vpop.f32.mrb[0].mxu0
      %767 = vmatprep.mubr.f32.mxu0 0.0
      %768 = vmatmul.mubr.f32.gmra.mrb[0].mxu0 %v318
      %v769 = vpop.f32.mrb[0].mxu0
      %v770 = vadd.f32 %v311, %v769
      %v771 = vpop.f32.mrb[0].mxu0
      %772 = vmatprep.mubr.f32.mxu0 0.0
      %773 = vmatmul.mubr.f32.gmra.mrb[0].mxu0 %v321
      %v774 = vpop.f32.mrb[0].mxu0
      %v775 = vadd.f32 %v311, %v774
      %v776 = vpop.f32.mrb[0].mxu0
      %777 = vmatprep.mubr.f32.mxu0 0.0
      %778 = vmatmul.mubr.f32.gmra.mrb[0].mxu0 %v324
      %v779 = vpop.f32.mrb[0].mxu0
      %v780 = vadd.f32 %v311, %v779
      %v781 = vpop.f32.mrb[0].mxu0
      %782 = vmatprep.mubr.f32.mxu0 0.0
      %783 = vmatmul.mubr.f32.gmra.mrb[0].mxu0 %v327
      %v784 = vpop.f32.mrb[0].mxu0
      %v785 = vadd.f32 %v311, %v784
      %v786 = vpop.f32.mrb[0].mxu0
      %787 = vmatprep.mubr.f32.mxu0 0.0
      %788 = vmatmul.mubr.f32.gmra.mrb[0].mxu0 %v330
      %v789 = vpop.f32.mrb[0].mxu0
      %v790 = vadd.f32 %v311, %v789
      %v791 = vpop.f32.mrb[0].mxu0
      %792 = vmatprep.mubr.f32.mxu0 0.0
      %793 = vmatmul.mubr.f32.gmra.mrb[0].mxu0 %v333
      %v794 = vpop.f32.mrb[0].mxu0
      %v795 = vadd.f32 %v311, %v794
      %v796 = vpop.f32.mrb[0].mxu0
      %797 = vmatprep.mubr.f32.mxu0 0.0
      %798 = vmatmul.mubr.f32.gmra.mrb[0].mxu0 %v336
      %v799 = vpop.f32.mrb[0].mxu0
      %v800 = vadd.f32 %v311, %v799
      %v801 = vpop.f32.mrb[0].mxu0
      %802 = vmatprep.mubr.f32.mxu0 0.0
      %803 = vmatmul.mubr.f32.gmra.mrb[0].mxu0 %v339
      %v804 = vpop.f32.mrb[0].mxu0
      %v805 = vadd.f32 %v311, %v804
      %v806 = vpop.f32.mrb[0].mxu0
      %807 = vmatprep.mubr.f32.mxu0 0.0
      %808 = vmatmul.mubr.f32.gmra.mrb[0].mxu0 %v342
      %v809 = vpop.f32.mrb[0].mxu0
      %v810 = vadd.f32 %v311, %v809
      %v811 = vpop.f32.mrb[0].mxu0
      %812 = vmatprep.mubr.f32.mxu0 0.0
      %813 = vmatmul.mubr.f32.gmra.mrb[0].mxu0 %v345
      %v814 = vpop.f32.mrb[0].mxu0
      %v815 = vadd.f32 %v311, %v814
      %v816 = vpop.f32.mrb[0].mxu0
      %817 = vmatprep.mubr.f32.mxu0 0.0
      %818 = vmatmul.mubr.f32.gmra.mrb[0].mxu0 %v348
      %v819 = vpop.f32.mrb[0].mxu0
      %v820 = vadd.f32 %v311, %v819
      %v821 = vpop.f32.mrb[0].mxu0
      %822 = vmatprep.mubr.f32.mxu0 0.0
      %823 = vmatmul.mubr.f32.gmra.mrb[0].mxu0 %v351
      %v824 = vpop.f32.mrb[0].mxu0
      %v825 = vadd.f32 %v311, %v824
      %v826 = vpop.f32.mrb[0].mxu0
      %827 = vmatprep.mubr.f32.mxu0 0.0
      %828 = vmatmul.mubr.f32.gmra.mrb[0].mxu0 %v354
      %v829 = vpop.f32.mrb[0].mxu0
      %v830 = vadd.f32 %v311, %v829
      %v831 = vpop.f32.mrb[0].mxu0
      %832 = vmatprep.mubr.f32.mxu0 0.0
      %833 = vmatmul.mubr.f32.gmra.mrb[0].mxu0 %v357
      %v834 = vpop.f32.mrb[0].mxu0
      %v835 = vadd.f32 %v311, %v834
      %v836 = vpop.f32.mrb[0].mxu0
      %837 = vmatprep.mubr.f32.mxu0 0.0
      %838 = vmatmul.mubr.f32.gmra.mrb[0].mxu0 %v360
      %v839 = vpop.f32.mrb[0].mxu0
      %v840 = vadd.f32 %v311, %v839
      %v841 = vpop.f32.mrb[0].mxu0
      %842 = vmatprep.mubr.f32.mxu0 0.0
      %843 = vmatmul.mubr.f32.gmra.mrb[0].mxu0 %v363
      %v844 = vpop.f32.mrb[0].mxu0
      %v845 = vadd.f32 %v311, %v844
      %v846 = vpop.f32.mrb[0].mxu0
      %847 = vmatprep.mubr.f32.mxu0 0.0
      %848 = vmatmul.mubr.f32.gmra.mrb[0].mxu0 %v366
      %v849 = vpop.f32.mrb[0].mxu0
      %v850 = vadd.f32 %v311, %v849
      %v851 = vpop.f32.mrb[0].mxu0
      %852 = vmatprep.mubr.f32.mxu0 0.0
      %853 = vmatmul.mubr.f32.gmra.mrb[0].mxu0 %v369
      %v854 = vpop.f32.mrb[0].mxu0
      %v855 = vadd.f32 %v311, %v854
      %v856 = vpop.f32.mrb[0].mxu0
      %857 = vmatprep.mubr.f32.mxu0 0.0
      %858 = vmatmul.mubr.f32.gmra.mrb[0].mxu0 %v372
      %v859 = vpop.f32.mrb[0].mxu0
      %v860 = vadd.f32 %v311, %v859
      %v861 = vpop.f32.mrb[0].mxu0
      %862 = vmatprep.mubr.f32.mxu0 0.0
      %863 = vmatmul.mubr.f32.gmra.mrb[0].mxu0 %v375
      %v864 = vpop.f32.mrb[0].mxu0
      %v865 = vadd.f32 %v311, %v864
      %v866 = vpop.f32.mrb[0].mxu0
      %867 = vmatprep.mubr.f32.mxu0 0.0
      %868 = vmatmul.mubr.f32.gmra.mrb[0].mxu0 %v378
      %v869 = vpop.f32.mrb[0].mxu0
      %v870 = vadd.f32 %v311, %v869
      %v871 = vpop.f32.mrb[0].mxu0
      %872 = vmatprep.mubr.f32.mxu0 0.0
      %873 = vmatmul.mubr.f32.gmra.mrb[0].mxu0 %v381
      %v874 = vpop.f32.mrb[0].mxu0
      %v875 = vadd.f32 %v311, %v874
      %v876 = vpop.f32.mrb[0].mxu0
      %877 = vmatprep.mubr.f32.mxu0 0.0
      %878 = vmatmul.mubr.f32.gmra.mrb[0].mxu0 %v384
      %v879 = vpop.f32.mrb[0].mxu0
      %v880 = vadd.f32 %v311, %v879
      %v881 = vpop.f32.mrb[0].mxu0
      %882 = vmatprep.mubr.f32.mxu0 0.0
      %883 = vmatmul.mubr.f32.gmra.mrb[0].mxu0 %v387
      %v884 = vpop.f32.mrb[0].mxu0
      %v885 = vadd.f32 %v311, %v884
      %v886 = vpop.f32.mrb[0].mxu0
      %887 = vmatprep.mubr.f32.mxu0 0.0
      %888 = vmatmul.mubr.f32.gmra.mrb[0].mxu0 %v390
      %v889 = vpop.f32.mrb[0].mxu0
      %v890 = vadd.f32 %v311, %v889
      %v891 = vpop.f32.mrb[0].mxu0
      %892 = vmatprep.mubr.f32.mxu0 0.0
      %893 = vmatmul.mubr.f32.gmra.mrb[0].mxu0 %v393
      %v894 = vpop.f32.mrb[0].mxu0
      %v895 = vadd.f32 %v311, %v894
      %v896 = vpop.f32.mrb[0].mxu0
      %897 = vmatprep.mubr.f32.mxu0 0.0
      %898 = vmatmul.mubr.f32.gmra.mrb[0].mxu0 %v396
      %v899 = vpop.f32.mrb[0].mxu0
      %v900 = vadd.f32 %v311, %v899
      %v901 = vpop.f32.mrb[0].mxu0
      %902 = vmatprep.mubr.f32.mxu0 0.0
      %903 = vmatmul.mubr.f32.gmra.mrb[0].mxu0 %v399
      %v904 = vpop.f32.mrb[0].mxu0
      %v905 = vadd.f32 %v311, %v904
      %v906 = vpop.f32.mrb[0].mxu0
      %907 = vmatprep.mubr.f32.mxu0 0.0
      %908 = vmatmul.mubr.f32.gmra.mrb[0].mxu0 %v402
      %v909 = vpop.f32.mrb[0].mxu0
      %v910 = vadd.f32 %v311, %v909
      %v911 = vpop.f32.mrb[0].mxu0
      %912 = vmatprep.mubr.f32.mxu0 0.0
      %913 = vmatmul.mubr.f32.gmra.mrb[0].mxu0 %v405
      %v914 = vpop.f32.mrb[0].mxu0
      %v915 = vadd.f32 %v311, %v914
      %v916 = vpop.f32.mrb[0].mxu0
      %917 = vmatprep.mubr.f32.mxu0 0.0
      %918 = vmatmul.mubr.f32.gmra.mrb[0].mxu0 %v408
      %v919 = vpop.f32.mrb[0].mxu0
      %v920 = vadd.f32 %v311, %v919
      %v921 = vpop.f32.mrb[0].mxu0
      %922 = vmatprep.mubr.f32.mxu0 0.0
      %923 = vmatmul.mubr.f32.gmra.mrb[0].mxu0 %v411
      %v924 = vpop.f32.mrb[0].mxu0
      %v925 = vadd.f32 %v311, %v924
      %v926 = vpop.f32.mrb[0].mxu0
      %927 = vmatprep.mubr.f32.mxu0 0.0
      %928 = vmatmul.mubr.f32.gmra.mrb[0].mxu0 %v414
      %v929 = vpop.f32.mrb[0].mxu0
      %v930 = vadd.f32 %v311, %v929
      %v931 = vpop.f32.mrb[0].mxu0
      %932 = vmatprep.mubr.f32.mxu0 0.0
      %933 = vmatmul.mubr.f32.gmra.mrb[0].mxu0 %v417
      %v934 = vpop.f32.mrb[0].mxu0
      %v935 = vadd.f32 %v311, %v934
      %v936 = vpop.f32.mrb[0].mxu0
      %937 = vmatprep.mubr.f32.mxu0 0.0
      %938 = vmatmul.mubr.f32.gmra.mrb[0].mxu0 %v420
      %v939 = vpop.f32.mrb[0].mxu0
      %v940 = vadd.f32 %v311, %v939
      %v941 = vpop.f32.mrb[0].mxu0
      %942 = vmatprep.mubr.f32.mxu0 0.0
      %943 = vmatmul.mubr.f32.gmra.mrb[0].mxu0 %v423
      %v944 = vpop.f32.mrb[0].mxu0
      %v945 = vadd.f32 %v311, %v944
      %v946 = vpop.f32.mrb[0].mxu0
      %947 = vmatprep.mubr.f32.mxu0 0.0
      %948 = vmatmul.mubr.f32.gmra.mrb[0].mxu0 %v426
      %v949 = vpop.f32.mrb[0].mxu0
      %v950 = vadd.f32 %v311, %v949
      %v951 = vpop.f32.mrb[0].mxu0
      %952 = vmatprep.mubr.f32.mxu0 0.0
      %953 = vmatmul.mubr.f32.gmra.mrb[0].mxu0 %v429
      %v954 = vpop.f32.mrb[0].mxu0
      %v955 = vadd.f32 %v311, %v954
      %v956 = vpop.f32.mrb[0].mxu0
      %957 = vmatprep.mubr.f32.mxu0 0.0
      %958 = vmatmul.mubr.f32.gmra.mrb[0].mxu0 %v432
      %v959 = vpop.f32.mrb[0].mxu0
      %v960 = vadd.f32 %v311, %v959
      %v961 = vpop.f32.mrb[0].mxu0
      %962 = vmatprep.mubr.f32.mxu0 0.0
      %963 = vmatmul.mubr.f32.gmra.mrb[0].mxu0 %v435
      %v964 = vpop.f32.mrb[0].mxu0
      %v965 = vadd.f32 %v311, %v964
      %v966 = vpop.f32.mrb[0].mxu0
      %967 = vmatprep.mubr.f32.mxu0 0.0
      %968 = vmatmul.mubr.f32.gmra.mrb[0].mxu0 %v438
      %v969 = vpop.f32.mrb[0].mxu0
      %v970 = vadd.f32 %v311, %v969
      %v971 = vpop.f32.mrb[0].mxu0
      %972 = vmatprep.mubr.f32.mxu0 0.0
      %973 = vmatmul.mubr.f32.gmra.mrb[0].mxu0 %v441
      %v974 = vpop.f32.mrb[0].mxu0
      %v975 = vadd.f32 %v311, %v974
      %v976 = vpop.f32.mrb[0].mxu0
      %977 = vmatprep.mubr.f32.mxu0 0.0
      %978 = vmatmul.mubr.f32.gmra.mrb[0].mxu0 %v444
      %v979 = vpop.f32.mrb[0].mxu0
      %v980 = vadd.f32 %v311, %v979
      %v981 = vpop.f32.mrb[0].mxu0
      %982 = vmatprep.mubr.f32.mxu0 0.0
      %983 = vmatmul.mubr.f32.gmra.mrb[0].mxu0 %v447
      %v984 = vpop.f32.mrb[0].mxu0
      %v985 = vadd.f32 %v311, %v984
      %v986 = vpop.f32.mrb[0].mxu0
      %987 = vmatprep.mubr.f32.mxu0 0.0
      %988 = vmatmul.mubr.f32.gmra.mrb[0].mxu0 %v450
      %v989 = vpop.f32.mrb[0].mxu0
      %v990 = vadd.f32 %v311, %v989
      %v991 = vpop.f32.mrb[0].mxu0
      %992 = vmatprep.mubr.f32.mxu0 0.0
      %993 = vmatmul.mubr.f32.gmra.mrb[0].mxu0 %v453
      %v994 = vpop.f32.mrb[0].mxu0
      %v995 = vadd.f32 %v311, %v994
      %v996 = vpop.f32.mrb[0].mxu0
      %997 = vmatprep.mubr.f32.mxu0 0.0
      %998 = vmatmul.mubr.f32.gmra.mrb[0].mxu0 %v456
      %v999 = vpop.f32.mrb[0].mxu0
      %v1000 = vadd.f32 %v311, %v999
      %v1001 = vpop.f32.mrb[0].mxu0
      %1002 = vmatprep.mubr.f32.mxu0 0.0
      %1003 = vmatmul.mubr.f32.gmra.mrb[0].mxu0 %v459
      %v1004 = vpop.f32.mrb[0].mxu0
      %v1005 = vadd.f32 %v311, %v1004
      %v1006 = vpop.f32.mrb[0].mxu0
      %1007 = vmatprep.mubr.f32.mxu0 0.0
      %1008 = vmatmul.mubr.f32.gmra.mrb[0].mxu0 %v462
      %v1009 = vpop.f32.mrb[0].mxu0
      %v1010 = vadd.f32 %v311, %v1009
      %v1011 = vpop.f32.mrb[0].mxu0
      %1012 = vmatprep.mubr.f32.mxu0 0.0
      %1013 = vmatmul.mubr.f32.gmra.mrb[0].mxu0 %v465
      %v1014 = vpop.f32.mrb[0].mxu0
      %v1015 = vadd.f32 %v311, %v1014
      %v1016 = vpop.f32.mrb[0].mxu0
      %1017 = vmatprep.mubr.f32.mxu0 0.0
      %1018 = vmatmul.mubr.f32.gmra.mrb[0].mxu0 %v468
      %v1019 = vpop.f32.mrb[0].mxu0
      %v1020 = vadd.f32 %v311, %v1019
      %v1021 = vpop.f32.mrb[0].mxu0
      %1022 = vmatprep.mubr.f32.mxu0 0.0
      %1023 = vmatmul.mubr.f32.gmra.mrb[0].mxu0 %v471
      %v1024 = vpop.f32.mrb[0].mxu0
      %v1025 = vadd.f32 %v311, %v1024
      %v1026 = vpop.f32.mrb[0].mxu0
      %1027 = vmatprep.mubr.f32.mxu0 0.0
      %1028 = vmatmul.mubr.f32.gmra.mrb[0].mxu0 %v474
      %v1029 = vpop.f32.mrb[0].mxu0
      %v1030 = vadd.f32 %v311, %v1029
      %v1031 = vpop.f32.mrb[0].mxu0
      %1032 = vmatprep.mubr.f32.mxu0 0.0
      %1033 = vmatmul.mubr.f32.gmra.mrb[0].mxu0 %v477
      %v1034 = vpop.f32.mrb[0].mxu0
      %v1035 = vadd.f32 %v311, %v1034
      %v1036 = vpop.f32.mrb[0].mxu0
      %1037 = vmatprep.mubr.f32.mxu0 0.0
      %1038 = vmatmul.mubr.f32.gmra.mrb[0].mxu0 %v480
      %v1039 = vpop.f32.mrb[0].mxu0
      %v1040 = vadd.f32 %v311, %v1039
      %v1041 = vpop.f32.mrb[0].mxu0
      %1042 = vmatprep.mubr.f32.mxu0 0.0
      %1043 = vmatmul.mubr.f32.gmra.mrb[0].mxu0 %v483
      %v1044 = vpop.f32.mrb[0].mxu0
      %v1045 = vadd.f32 %v311, %v1044
      %v1046 = vpop.f32.mrb[0].mxu0
      %1047 = vmatprep.mubr.f32.mxu0 0.0
      %1048 = vmatmul.mubr.f32.gmra.mrb[0].mxu0 %v486
      %v1049 = vpop.f32.mrb[0].mxu0
      %v1050 = vadd.f32 %v311, %v1049
      %v1051 = vpop.f32.mrb[0].mxu0
      %1052 = vmatprep.mubr.f32.mxu0 0.0
      %1053 = vmatmul.mubr.f32.gmra.mrb[0].mxu0 %v489
      %v1054 = vpop.f32.mrb[0].mxu0
      %v1055 = vadd.f32 %v311, %v1054
      %v1056 = vpop.f32.mrb[0].mxu0
      %1057 = vmatprep.mubr.f32.mxu0 0.0
      %1058 = vmatmul.mubr.f32.gmra.mrb[0].mxu0 %v492
      %v1059 = vpop.f32.mrb[0].mxu0
      %v1060 = vadd.f32 %v311, %v1059
      %v1061 = vpop.f32.mrb[0].mxu0
      %1062 = vmatprep.mubr.f32.mxu0 0.0
      %1063 = vmatmul.mubr.f32.gmra.mrb[0].mxu0 %v495
      %v1064 = vpop.f32.mrb[0].mxu0
      %v1065 = vadd.f32 %v311, %v1064
      %v1066 = vpop.f32.mrb[0].mxu0
      %1067 = vmatprep.mubr.f32.mxu0 0.0
      %1068 = vmatmul.mubr.f32.gmra.mrb[0].mxu0 %v498
      %v1069 = vpop.f32.mrb[0].mxu0
      %v1070 = vadd.f32 %v311, %v1069
      %v1071 = vpop.f32.mrb[0].mxu0
      %1072 = vmatprep.mubr.f32.mxu0 0.0
      %1073 = vmatmul.mubr.f32.gmra.mrb[0].mxu0 %v501
      %v1074 = vpop.f32.mrb[0].mxu0
      %v1075 = vadd.f32 %v311, %v1074
      %v1076 = vpop.f32.mrb[0].mxu0
      %1077 = vmatprep.mubr.f32.mxu0 0.0
      %1078 = vmatmul.mubr.f32.gmra.mrb[0].mxu0 %v504
      %v1079 = vpop.f32.mrb[0].mxu0
      %v1080 = vadd.f32 %v311, %v1079
      %v1081 = vpop.f32.mrb[0].mxu0
      %1082 = vmatprep.mubr.f32.mxu0 0.0
      %1083 = vmatmul.mubr.f32.gmra.mrb[0].mxu0 %v507
      %v1084 = vpop.f32.mrb[0].mxu0
      %v1085 = vadd.f32 %v311, %v1084
      %v1086 = vpop.f32.mrb[0].mxu0
      %1087 = vmatprep.mubr.f32.mxu0 0.0
      %1088 = vmatmul.mubr.f32.gmra.mrb[0].mxu0 %v510
      %v1089 = vpop.f32.mrb[0].mxu0
      %v1090 = vadd.f32 %v311, %v1089
      %v1091 = vpop.f32.mrb[0].mxu0
      %1092 = vmatprep.mubr.f32.mxu0 0.0
      %1093 = vmatmul.mubr.f32.gmra.mrb[0].mxu0 %v513
      %v1094 = vpop.f32.mrb[0].mxu0
      %v1095 = vadd.f32 %v311, %v1094
      %v1096 = vpop.f32.mrb[0].mxu0
      %1097 = vmatprep.mubr.f32.mxu0 0.0
      %1098 = vmatmul.mubr.f32.gmra.mrb[0].mxu0 %v516
      %v1099 = vpop.f32.mrb[0].mxu0
      %v1100 = vadd.f32 %v311, %v1099
      %v1101 = vpop.f32.mrb[0].mxu0
      %1102 = vmatprep.mubr.f32.mxu0 0.0
      %1103 = vmatmul.mubr.f32.gmra.mrb[0].mxu0 %v519
      %v1104 = vpop.f32.mrb[0].mxu0
      %v1105 = vadd.f32 %v311, %v1104
      %v1106 = vpop.f32.mrb[0].mxu0
      %1107 = vmatprep.mubr.f32.mxu0 0.0
      %1108 = vmatmul.mubr.f32.gmra.mrb[0].mxu0 %v522
      %v1109 = vpop.f32.mrb[0].mxu0
      %v1110 = vadd.f32 %v311, %v1109
      %v1111 = vpop.f32.mrb[0].mxu0
      %1112 = vmatprep.mubr.f32.mxu0 0.0
      %1113 = vmatmul.mubr.f32.gmra.mrb[0].mxu0 %v525
      %v1114 = vpop.f32.mrb[0].mxu0
      %v1115 = vadd.f32 %v311, %v1114
      %v1116 = vpop.f32.mrb[0].mxu0
      %1117 = vmatprep.mubr.f32.mxu0 0.0
      %1118 = vmatmul.mubr.f32.gmra.mrb[0].mxu0 %v528
      %v1119 = vpop.f32.mrb[0].mxu0
      %v1120 = vadd.f32 %v311, %v1119
      %v1121 = vpop.f32.mrb[0].mxu0
      %1122 = vmatprep.mubr.f32.mxu0 0.0
      %1123 = vmatmul.mubr.f32.gmra.mrb[0].mxu0 %v531
      %v1124 = vpop.f32.mrb[0].mxu0
      %v1125 = vadd.f32 %v311, %v1124
      %v1126 = vpop.f32.mrb[0].mxu0
      %1127 = vmatprep.mubr.f32.mxu0 0.0
      %1128 = vmatmul.mubr.f32.gmra.mrb[0].mxu0 %v534
      %v1129 = vpop.f32.mrb[0].mxu0
      %v1130 = vadd.f32 %v311, %v1129
      %v1131 = vpop.f32.mrb[0].mxu0
      %1132 = vmatprep.mubr.f32.mxu0 0.0
      %1133 = vmatmul.mubr.f32.gmra.mrb[0].mxu0 %v537
      %v1134 = vpop.f32.mrb[0].mxu0
      %v1135 = vadd.f32 %v311, %v1134
      %v1136 = vpop.f32.mrb[0].mxu0
      %1137 = vmatprep.mubr.f32.mxu0 0.0
      %1138 = vmatmul.mubr.f32.gmra.mrb[0].mxu0 %v540
      %v1139 = vpop.f32.mrb[0].mxu0
      %v1140 = vadd.f32 %v311, %v1139
      %v1141 = vpop.f32.mrb[0].mxu0
      %1142 = vmatprep.mubr.f32.mxu0 0.0
      %1143 = vmatmul.mubr.f32.gmra.mrb[0].mxu0 %v543
      %v1144 = vpop.f32.mrb[0].mxu0
      %v1145 = vadd.f32 %v311, %v1144
      %v1146 = vpop.f32.mrb[0].mxu0
      %1147 = vmatprep.mubr.f32.mxu0 0.0
      %1148 = vmatmul.mubr.f32.gmra.mrb[0].mxu0 %v546
      %v1149 = vpop.f32.mrb[0].mxu0
      %v1150 = vadd.f32 %v311, %v1149
      %v1151 = vpop.f32.mrb[0].mxu0
      %1152 = vmatprep.mubr.f32.mxu0 0.0
      %1153 = vmatmul.mubr.f32.gmra.mrb[0].mxu0 %v549
      %v1154 = vpop.f32.mrb[0].mxu0
      %v1155 = vadd.f32 %v311, %v1154
      %v1156 = vpop.f32.mrb[0].mxu0
      %1157 = vmatprep.mubr.f32.mxu0 0.0
      %1158 = vmatmul.mubr.f32.gmra.mrb[0].mxu0 %v552
      %v1159 = vpop.f32.mrb[0].mxu0
      %v1160 = vadd.f32 %v311, %v1159
      %v1161 = vpop.f32.mrb[0].mxu0
      %1162 = vmatprep.mubr.f32.mxu0 0.0
      %1163 = vmatmul.mubr.f32.gmra.mrb[0].mxu0 %v555
      %v1164 = vpop.f32.mrb[0].mxu0
      %v1165 = vadd.f32 %v311, %v1164
      %v1166 = vpop.f32.mrb[0].mxu0
      %1167 = vmatprep.mubr.f32.mxu0 0.0
      %1168 = vmatmul.mubr.f32.gmra.mrb[0].mxu0 %v558
      %v1169 = vpop.f32.mrb[0].mxu0
      %v1170 = vadd.f32 %v311, %v1169
      %v1171 = vpop.f32.mrb[0].mxu0
      %1172 = vmatprep.mubr.f32.mxu0 0.0
      %1173 = vmatmul.mubr.f32.gmra.mrb[0].mxu0 %v561
      %v1174 = vpop.f32.mrb[0].mxu0
      %v1175 = vadd.f32 %v311, %v1174
      %v1176 = vpop.f32.mrb[0].mxu0
      %1177 = vmatprep.mubr.f32.mxu0 0.0
      %1178 = vmatmul.mubr.f32.gmra.mrb[0].mxu0 %v564
      %v1179 = vpop.f32.mrb[0].mxu0
      %v1180 = vadd.f32 %v311, %v1179
      %v1181 = vpop.f32.mrb[0].mxu0
      %1182 = vmatprep.mubr.f32.mxu0 0.0
      %1183 = vmatmul.mubr.f32.gmra.mrb[0].mxu0 %v567
      %v1184 = vpop.f32.mrb[0].mxu0
      %v1185 = vadd.f32 %v311, %v1184
      %v1186 = vpop.f32.mrb[0].mxu0
      %1187 = vmatprep.mubr.f32.mxu0 0.0
      %1188 = vmatmul.mubr.f32.gmra.mrb[0].mxu0 %v570
      %v1189 = vpop.f32.mrb[0].mxu0
      %v1190 = vadd.f32 %v311, %v1189
      %v1191 = vpop.f32.mrb[0].mxu0
      %1192 = vmatprep.mubr.f32.mxu0 0.0
      %1193 = vmatmul.mubr.f32.gmra.mrb[0].mxu0 %v573
      %v1194 = vpop.f32.mrb[0].mxu0
      %v1195 = vadd.f32 %v311, %v1194
      %v1196 = vpop.f32.mrb[0].mxu0
      %1197 = vmatprep.mubr.f32.mxu0 0.0
      %1198 = vmatmul.mubr.f32.gmra.mrb[0].mxu0 %v576
      %v1199 = vpop.f32.mrb[0].mxu0
      %v1200 = vadd.f32 %v311, %v1199
      %v1201 = vpop.f32.mrb[0].mxu0
      %1202 = vmatprep.mubr.f32.mxu0 0.0
      %1203 = vmatmul.mubr.f32.gmra.mrb[0].mxu0 %v579
      %v1204 = vpop.f32.mrb[0].mxu0
      %v1205 = vadd.f32 %v311, %v1204
      %v1206 = vpop.f32.mrb[0].mxu0
      %1207 = vmatprep.mubr.f32.mxu0 0.0
      %1208 = vmatmul.mubr.f32.gmra.mrb[0].mxu0 %v582
      %v1209 = vpop.f32.mrb[0].mxu0
      %v1210 = vadd.f32 %v311, %v1209
      %v1211 = vpop.f32.mrb[0].mxu0
      %1212 = vmatprep.mubr.f32.mxu0 0.0
      %1213 = vmatmul.mubr.f32.gmra.mrb[0].mxu0 %v585
      %v1214 = vpop.f32.mrb[0].mxu0
      %v1215 = vadd.f32 %v311, %v1214
      %v1216 = vpop.f32.mrb[0].mxu0
      %1217 = vmatprep.mubr.f32.mxu0 0.0
      %1218 = vmatmul.mubr.f32.gmra.mrb[0].mxu0 %v588
      %v1219 = vpop.f32.mrb[0].mxu0
      %v1220 = vadd.f32 %v311, %v1219
      %v1221 = vpop.f32.mrb[0].mxu0
      %1222 = vmatprep.mubr.f32.mxu0 0.0
      %1223 = vmatmul.mubr.f32.gmra.mrb[0].mxu0 %v591
      %v1224 = vpop.f32.mrb[0].mxu0
      %v1225 = vadd.f32 %v311, %v1224
      %v1226 = vpop.f32.mrb[0].mxu0
      %1227 = vmatprep.mubr.f32.mxu0 0.0
      %1228 = vmatmul.mubr.f32.gmra.mrb[0].mxu0 %v594
      %v1229 = vpop.f32.mrb[0].mxu0
      %v1230 = vadd.f32 %v311, %v1229
      %v1231 = vpop.f32.mrb[0].mxu0
      %1232 = vmatprep.mubr.f32.mxu0 0.0
      %1233 = vmatmul.mubr.f32.gmra.mrb[0].mxu0 %v597
      %v1234 = vpop.f32.mrb[0].mxu0
      %v1235 = vadd.f32 %v311, %v1234
      %v1236 = vpop.f32.mrb[0].mxu0
      %1237 = vmatprep.mubr.f32.mxu0 0.0
      %1238 = vmatmul.mubr.f32.gmra.mrb[0].mxu0 %v600
      %v1239 = vpop.f32.mrb[0].mxu0
      %v1240 = vadd.f32 %v311, %v1239
      %v1241 = vpop.f32.mrb[0].mxu0
      %1242 = vmatprep.mubr.f32.mxu0 0.0
      %1243 = vmatmul.mubr.f32.gmra.mrb[0].mxu0 %v603
      %v1244 = vpop.f32.mrb[0].mxu0
      %v1245 = vadd.f32 %v311, %v1244
      %v1246 = vpop.f32.mrb[0].mxu0
      %1247 = vmatprep.mubr.f32.mxu0 0.0
      %1248 = vmatmul.mubr.f32.gmra.mrb[0].mxu0 %v606
      %v1249 = vpop.f32.mrb[0].mxu0
      %v1250 = vadd.f32 %v311, %v1249
      %v1251 = vpop.f32.mrb[0].mxu0
      %1252 = vmatprep.mubr.f32.mxu0 0.0
      %1253 = vmatmul.mubr.f32.gmra.mrb[0].mxu0 %v609
      %v1254 = vpop.f32.mrb[0].mxu0
      %v1255 = vadd.f32 %v311, %v1254
      %v1256 = vpop.f32.mrb[0].mxu0
      %1257 = vmatprep.mubr.f32.mxu0 0.0
      %1258 = vmatmul.mubr.f32.gmra.mrb[0].mxu0 %v612
      %v1259 = vpop.f32.mrb[0].mxu0
      %v1260 = vadd.f32 %v311, %v1259
      %v1261 = vpop.f32.mrb[0].mxu0
      %1262 = vmatprep.mubr.f32.mxu0 0.0
      %1263 = vmatmul.mubr.f32.gmra.mrb[0].mxu0 %v615
      %v1264 = vpop.f32.mrb[0].mxu0
      %v1265 = vadd.f32 %v311, %v1264
      %v1266 = vpop.f32.mrb[0].mxu0
      %1267 = vmatprep.mubr.f32.mxu0 0.0
      %1268 = vmatmul.mubr.f32.gmra.mrb[0].mxu0 %v618
      %v1269 = vpop.f32.mrb[0].mxu0
      %v1270 = vadd.f32 %v311, %v1269
      %v1271 = vpop.f32.mrb[0].mxu0
      %1272 = vmatprep.mubr.f32.mxu0 0.0
      %1273 = vmatmul.mubr.f32.gmra.mrb[0].mxu0 %v621
      %v1274 = vpop.f32.mrb[0].mxu0
      %v1275 = vadd.f32 %v311, %v1274
      %v1276 = vpop.f32.mrb[0].mxu0
      %1277 = vmatprep.mubr.f32.mxu0 0.0
      %1278 = vmatmul.mubr.f32.gmra.mrb[0].mxu0 %v624
      %v1279 = vpop.f32.mrb[0].mxu0
      %v1280 = vadd.f32 %v311, %v1279
      %v1281 = vpop.f32.mrb[0].mxu0
      %1282 = vmatprep.mubr.f32.mxu0 0.0
      %1283 = vmatmul.mubr.f32.gmra.mrb[0].mxu0 %v627
      %v1284 = vpop.f32.mrb[0].mxu0
      %v1285 = vadd.f32 %v311, %v1284
      %v1286 = vpop.f32.mrb[0].mxu0
      %1287 = vmatprep.mubr.f32.mxu0 0.0
      %1288 = vmatmul.mubr.f32.gmra.mrb[0].mxu0 %v630
      %v1289 = vpop.f32.mrb[0].mxu0
      %v1290 = vadd.f32 %v311, %v1289
      %v1291 = vpop.f32.mrb[0].mxu0
      %1292 = vmatprep.mubr.f32.mxu0 0.0
      %1293 = vmatmul.mubr.f32.gmra.mrb[0].mxu0 %v633
      %v1294 = vpop.f32.mrb[0].mxu0
      %v1295 = vadd.f32 %v311, %v1294
      %v1296 = vpop.f32.mrb[0].mxu0
      %1297 = vmatprep.mubr.f32.mxu0 0.0
      %1298 = vmatmul.mubr.f32.gmra.mrb[0].mxu0 %v636
      %v1299 = vpop.f32.mrb[0].mxu0
      %v1300 = vadd.f32 %v311, %v1299
      %v1301 = vpop.f32.mrb[0].mxu0
      %1302 = vmatprep.mubr.f32.mxu0 0.0
      %1303 = vmatmul.mubr.f32.gmra.mrb[0].mxu0 %v639
      %v1304 = vpop.f32.mrb[0].mxu0
      %v1305 = vadd.f32 %v311, %v1304
      %v1306 = vpop.f32.mrb[0].mxu0
      %1307 = vmatprep.mubr.f32.mxu0 0.0
      %1308 = vmatmul.mubr.f32.gmra.mrb[0].mxu0 %v642
      %v1309 = vpop.f32.mrb[0].mxu0
      %v1310 = vadd.f32 %v311, %v1309
      %v1311 = vpop.f32.mrb[0].mxu0
      %1312 = vmatprep.mubr.f32.mxu0 0.0
      %1313 = vmatmul.mubr.f32.gmra.mrb[0].mxu0 %v645
      %v1314 = vpop.f32.mrb[0].mxu0
      %v1315 = vadd.f32 %v311, %v1314
      %v1316 = vpop.f32.mrb[0].mxu0
      %1317 = vmatprep.mubr.f32.mxu0 0.0
      %1318 = vmatmul.mubr.f32.gmra.mrb[0].mxu0 %v648
      %v1319 = vpop.f32.mrb[0].mxu0
      %v1320 = vadd.f32 %v311, %v1319
      %v1321 = vpop.f32.mrb[0].mxu0
      %1322 = vmatprep.mubr.f32.mxu0 0.0
      %1323 = vmatmul.mubr.f32.gmra.mrb[0].mxu0 %v651
      %v1324 = vpop.f32.mrb[0].mxu0
      %v1325 = vadd.f32 %v311, %v1324
      %v1326 = vpop.f32.mrb[0].mxu0
      %1327 = vmatprep.mubr.f32.mxu0 0.0
      %1328 = vmatmul.mubr.f32.gmra.mrb[0].mxu0 %v654
      %v1329 = vpop.f32.mrb[0].mxu0
      %v1330 = vadd.f32 %v311, %v1329
      %v1331 = vpop.f32.mrb[0].mxu0
      %1332 = vmatprep.mubr.f32.mxu0 0.0
      %1333 = vmatmul.mubr.f32.gmra.mrb[0].mxu0 %v657
      %v1334 = vpop.f32.mrb[0].mxu0
      %v1335 = vadd.f32 %v311, %v1334
      %v1336 = vpop.f32.mrb[0].mxu0
      %1337 = vmatprep.mubr.f32.mxu0 0.0
      %1338 = vmatmul.mubr.f32.gmra.mrb[0].mxu0 %v660
      %v1339 = vpop.f32.mrb[0].mxu0
      %v1340 = vadd.f32 %v311, %v1339
      %v1341 = vpop.f32.mrb[0].mxu0
      %1342 = vmatprep.mubr.f32.mxu0 0.0
      %1343 = vmatmul.mubr.f32.gmra.mrb[0].mxu0 %v663
      %v1344 = vpop.f32.mrb[0].mxu0
      %v1345 = vadd.f32 %v311, %v1344
      %v1346 = vpop.f32.mrb[0].mxu0
      %1347 = vmatprep.mubr.f32.mxu0 0.0
      %1348 = vmatmul.mubr.f32.gmra.mrb[0].mxu0 %v666
      %v1349 = vpop.f32.mrb[0].mxu0
      %v1350 = vadd.f32 %v311, %v1349
      %v1351 = vpop.f32.mrb[0].mxu0
      %1352 = vmatprep.mubr.f32.mxu0 0.0
      %1353 = vmatmul.mubr.f32.gmra.mrb[0].mxu0 %v669
      %v1354 = vpop.f32.mrb[0].mxu0
      %v1355 = vadd.f32 %v311, %v1354
      %v1356 = vpop.f32.mrb[0].mxu0
      %1357 = vmatprep.mubr.f32.mxu0 0.0
      %1358 = vmatmul.mubr.f32.gmra.mrb[0].mxu0 %v672
      %v1359 = vpop.f32.mrb[0].mxu0
      %v1360 = vadd.f32 %v311, %v1359
      %v1361 = vpop.f32.mrb[0].mxu0
      %1362 = vmatprep.mubr.f32.mxu0 0.0
      %1363 = vmatmul.mubr.f32.gmra.mrb[0].mxu0 %v675
      %v1364 = vpop.f32.mrb[0].mxu0
      %v1365 = vadd.f32 %v311, %v1364
      %v1366 = vpop.f32.mrb[0].mxu0
      %1367 = vmatprep.mubr.f32.mxu0 0.0
      %1368 = vmatmul.mubr.f32.gmra.mrb[0].mxu0 %v678
      %v1369 = vpop.f32.mrb[0].mxu0
      %v1370 = vadd.f32 %v311, %v1369
      %v1371 = vpop.f32.mrb[0].mxu0
      %1372 = vmatprep.mubr.f32.mxu0 0.0
      %1373 = vmatmul.mubr.f32.gmra.mrb[0].mxu0 %v681
      %v1374 = vpop.f32.mrb[0].mxu0
      %v1375 = vadd.f32 %v311, %v1374
      %v1376 = vpop.f32.mrb[0].mxu0
      %1377 = vmatprep.mubr.f32.mxu0 0.0
      %1378 = vmatmul.mubr.f32.gmra.mrb[0].mxu0 %v684
      %v1379 = vpop.f32.mrb[0].mxu0
      %v1380 = vadd.f32 %v311, %v1379
      %v1381 = vpop.f32.mrb[0].mxu0
      %1382 = vmatprep.mubr.f32.mxu0 0.0
      %1383 = vmatmul.mubr.f32.gmra.mrb[0].mxu0 %v687
      %v1384 = vpop.f32.mrb[0].mxu0
      %v1385 = vadd.f32 %v311, %v1384
      %v1386 = vpop.f32.mrb[0].mxu0
      %1387 = vmatprep.mubr.f32.mxu0 0.0
      %1388 = vmatmul.mubr.f32.gmra.mrb[0].mxu0 %v690
      %v1389 = vpop.f32.mrb[0].mxu0
      %v1390 = vadd.f32 %v311, %v1389
      %v1391 = vpop.f32.mrb[0].mxu0
      %1392 = vmatprep.mubr.f32.mxu0 0.0
      %1393 = vmatmul.mubr.f32.gmra.mrb[0].mxu0 %v693
      %v1394 = vpop.f32.mrb[0].mxu0
      %v1395 = vadd.f32 %v311, %v1394
      %v1396 = vpop.f32.mrb[0].mxu0
      %1397 = vmatprep.mubr.f32.mxu0 0.0
      %1398 = vmatmul.mubr.f32.gmra.mrb[0].mxu0 %v696
      %v1399 = vpop.f32.mrb[0].mxu0
      %v1400 = vadd.f32 %v311, %v1399
      %v1401 = vpop.f32.mrb[0].mxu0
      %1402 = vdwg.mxu0
      %vm1403 = vcmask 523264
      %1404 = vst.msk [vmem:[%s172] sm:$0xff] %vm1403, %v765
      %1405 = vst.msk [vmem:[%s172 + $0x8] sm:$0xff] %vm1403, %v770
      %1406 = vst.msk [vmem:[%s172 + $0x10] sm:$0xff] %vm1403, %v775
      %1407 = vst.msk [vmem:[%s172 + $0x18] sm:$0xff] %vm1403, %v780
      %1408 = vst.msk [vmem:[%s172 + $0x20] sm:$0xff] %vm1403, %v785
      %1409 = vst.msk [vmem:[%s172 + $0x28] sm:$0xff] %vm1403, %v790
      %1410 = vst.msk [vmem:[%s172 + $0x30] sm:$0xff] %vm1403, %v795
      %1411 = vst.msk [vmem:[%s172 + $0x38] sm:$0xff] %vm1403, %v800
      %1412 = vst.msk [vmem:[%s172 + $0x40] sm:$0xff] %vm1403, %v805
      %1413 = vst.msk [vmem:[%s172 + $0x48] sm:$0xff] %vm1403, %v810
      %1414 = vst.msk [vmem:[%s172 + $0x50] sm:$0xff] %vm1403, %v815
      %1415 = vst.msk [vmem:[%s172 + $0x58] sm:$0xff] %vm1403, %v820
      %1416 = vst.msk [vmem:[%s172 + $0x60] sm:$0xff] %vm1403, %v825
      %1417 = vst.msk [vmem:[%s172 + $0x68] sm:$0xff] %vm1403, %v830
      %1418 = vst.msk [vmem:[%s172 + $0x70] sm:$0xff] %vm1403, %v835
      %1419 = vst.msk [vmem:[%s172 + $0x78] sm:$0xff] %vm1403, %v840
      %1420 = vst.msk [vmem:[%s172 + $0x80] sm:$0xff] %vm1403, %v845
      %1421 = vst.msk [vmem:[%s172 + $0x88] sm:$0xff] %vm1403, %v850
      %1422 = vst.msk [vmem:[%s172 + $0x90] sm:$0xff] %vm1403, %v855
      %1423 = vst.msk [vmem:[%s172 + $0x98] sm:$0xff] %vm1403, %v860
      %1424 = vst.msk [vmem:[%s172 + $0xa0] sm:$0xff] %vm1403, %v865
      %1425 = vst.msk [vmem:[%s172 + $0xa8] sm:$0xff] %vm1403, %v870
      %1426 = vst.msk [vmem:[%s172 + $0xb0] sm:$0xff] %vm1403, %v875
      %1427 = vst.msk [vmem:[%s172 + $0xb8] sm:$0xff] %vm1403, %v880
      %1428 = vst.msk [vmem:[%s172 + $0xc0] sm:$0xff] %vm1403, %v885
      %1429 = vst.msk [vmem:[%s172 + $0xc8] sm:$0xff] %vm1403, %v890
      %1430 = vst.msk [vmem:[%s172 + $0xd0] sm:$0xff] %vm1403, %v895
      %1431 = vst.msk [vmem:[%s172 + $0xd8] sm:$0xff] %vm1403, %v900
      %1432 = vst.msk [vmem:[%s172 + $0xe0] sm:$0xff] %vm1403, %v905
      %1433 = vst.msk [vmem:[%s172 + $0xe8] sm:$0xff] %vm1403, %v910
      %1434 = vst.msk [vmem:[%s172 + $0xf0] sm:$0xff] %vm1403, %v915
      %1435 = vst.msk [vmem:[%s172 + $0xf8] sm:$0xff] %vm1403, %v920
      %1436 = vst.msk [vmem:[%s172 + $0x100] sm:$0xff] %vm1403, %v925
      %1437 = vst.msk [vmem:[%s172 + $0x108] sm:$0xff] %vm1403, %v930
      %1438 = vst.msk [vmem:[%s172 + $0x110] sm:$0xff] %vm1403, %v935
      %1439 = vst.msk [vmem:[%s172 + $0x118] sm:$0xff] %vm1403, %v940
      %1440 = vst.msk [vmem:[%s172 + $0x120] sm:$0xff] %vm1403, %v945
      %1441 = vst.msk [vmem:[%s172 + $0x128] sm:$0xff] %vm1403, %v950
      %1442 = vst.msk [vmem:[%s172 + $0x130] sm:$0xff] %vm1403, %v955
      %1443 = vst.msk [vmem:[%s172 + $0x138] sm:$0xff] %vm1403, %v960
      %1444 = vst.msk [vmem:[%s172 + $0x140] sm:$0xff] %vm1403, %v965
      %1445 = vst.msk [vmem:[%s172 + $0x148] sm:$0xff] %vm1403, %v970
      %1446 = vst.msk [vmem:[%s172 + $0x150] sm:$0xff] %vm1403, %v975
      %1447 = vst.msk [vmem:[%s172 + $0x158] sm:$0xff] %vm1403, %v980
      %1448 = vst.msk [vmem:[%s172 + $0x160] sm:$0xff] %vm1403, %v985
      %1449 = vst.msk [vmem:[%s172 + $0x168] sm:$0xff] %vm1403, %v990
      %1450 = vst.msk [vmem:[%s172 + $0x170] sm:$0xff] %vm1403, %v995
      %1451 = vst.msk [vmem:[%s172 + $0x178] sm:$0xff] %vm1403, %v1000
      %1452 = vst.msk [vmem:[%s172 + $0x180] sm:$0xff] %vm1403, %v1005
      %1453 = vst.msk [vmem:[%s172 + $0x188] sm:$0xff] %vm1403, %v1010
      %1454 = vst.msk [vmem:[%s172 + $0x190] sm:$0xff] %vm1403, %v1015
      %1455 = vst.msk [vmem:[%s172 + $0x198] sm:$0xff] %vm1403, %v1020
      %1456 = vst.msk [vmem:[%s172 + $0x1a0] sm:$0xff] %vm1403, %v1025
      %1457 = vst.msk [vmem:[%s172 + $0x1a8] sm:$0xff] %vm1403, %v1030
      %1458 = vst.msk [vmem:[%s172 + $0x1b0] sm:$0xff] %vm1403, %v1035
      %1459 = vst.msk [vmem:[%s172 + $0x1b8] sm:$0xff] %vm1403, %v1040
      %1460 = vst.msk [vmem:[%s172 + $0x1c0] sm:$0xff] %vm1403, %v1045
      %1461 = vst.msk [vmem:[%s172 + $0x1c8] sm:$0xff] %vm1403, %v1050
      %1462 = vst.msk [vmem:[%s172 + $0x1d0] sm:$0xff] %vm1403, %v1055
      %1463 = vst.msk [vmem:[%s172 + $0x1d8] sm:$0xff] %vm1403, %v1060
      %1464 = vst.msk [vmem:[%s172 + $0x1e0] sm:$0xff] %vm1403, %v1065
      %1465 = vst.msk [vmem:[%s172 + $0x1e8] sm:$0xff] %vm1403, %v1070
      %1466 = vst.msk [vmem:[%s172 + $0x1f0] sm:$0xff] %vm1403, %v1075
      %1467 = vst.msk [vmem:[%s172 + $0x1f8] sm:$0xff] %vm1403, %v1080
      %1468 = vst.msk [vmem:[%s172 + $0x200] sm:$0xff] %vm1403, %v1085
      %1469 = vst.msk [vmem:[%s172 + $0x208] sm:$0xff] %vm1403, %v1090
      %1470 = vst.msk [vmem:[%s172 + $0x210] sm:$0xff] %vm1403, %v1095
      %1471 = vst.msk [vmem:[%s172 + $0x218] sm:$0xff] %vm1403, %v1100
      %1472 = vst.msk [vmem:[%s172 + $0x220] sm:$0xff] %vm1403, %v1105
      %1473 = vst.msk [vmem:[%s172 + $0x228] sm:$0xff] %vm1403, %v1110
      %1474 = vst.msk [vmem:[%s172 + $0x230] sm:$0xff] %vm1403, %v1115
      %1475 = vst.msk [vmem:[%s172 + $0x238] sm:$0xff] %vm1403, %v1120
      %1476 = vst.msk [vmem:[%s172 + $0x240] sm:$0xff] %vm1403, %v1125
      %1477 = vst.msk [vmem:[%s172 + $0x248] sm:$0xff] %vm1403, %v1130
      %1478 = vst.msk [vmem:[%s172 + $0x250] sm:$0xff] %vm1403, %v1135
      %1479 = vst.msk [vmem:[%s172 + $0x258] sm:$0xff] %vm1403, %v1140
      %1480 = vst.msk [vmem:[%s172 + $0x260] sm:$0xff] %vm1403, %v1145
      %1481 = vst.msk [vmem:[%s172 + $0x268] sm:$0xff] %vm1403, %v1150
      %1482 = vst.msk [vmem:[%s172 + $0x270] sm:$0xff] %vm1403, %v1155
      %1483 = vst.msk [vmem:[%s172 + $0x278] sm:$0xff] %vm1403, %v1160
      %1484 = vst.msk [vmem:[%s172 + $0x280] sm:$0xff] %vm1403, %v1165
      %1485 = vst.msk [vmem:[%s172 + $0x288] sm:$0xff] %vm1403, %v1170
      %1486 = vst.msk [vmem:[%s172 + $0x290] sm:$0xff] %vm1403, %v1175
      %1487 = vst.msk [vmem:[%s172 + $0x298] sm:$0xff] %vm1403, %v1180
      %1488 = vst.msk [vmem:[%s172 + $0x2a0] sm:$0xff] %vm1403, %v1185
      %1489 = vst.msk [vmem:[%s172 + $0x2a8] sm:$0xff] %vm1403, %v1190
      %1490 = vst.msk [vmem:[%s172 + $0x2b0] sm:$0xff] %vm1403, %v1195
      %1491 = vst.msk [vmem:[%s172 + $0x2b8] sm:$0xff] %vm1403, %v1200
      %1492 = vst.msk [vmem:[%s172 + $0x2c0] sm:$0xff] %vm1403, %v1205
      %1493 = vst.msk [vmem:[%s172 + $0x2c8] sm:$0xff] %vm1403, %v1210
      %1494 = vst.msk [vmem:[%s172 + $0x2d0] sm:$0xff] %vm1403, %v1215
      %1495 = vst.msk [vmem:[%s172 + $0x2d8] sm:$0xff] %vm1403, %v1220
      %1496 = vst.msk [vmem:[%s172 + $0x2e0] sm:$0xff] %vm1403, %v1225
      %1497 = vst.msk [vmem:[%s172 + $0x2e8] sm:$0xff] %vm1403, %v1230
      %1498 = vst.msk [vmem:[%s172 + $0x2f0] sm:$0xff] %vm1403, %v1235
      %1499 = vst.msk [vmem:[%s172 + $0x2f8] sm:$0xff] %vm1403, %v1240
      %1500 = vst.msk [vmem:[%s172 + $0x300] sm:$0xff] %vm1403, %v1245
      %1501 = vst.msk [vmem:[%s172 + $0x308] sm:$0xff] %vm1403, %v1250
      %1502 = vst.msk [vmem:[%s172 + $0x310] sm:$0xff] %vm1403, %v1255
      %1503 = vst.msk [vmem:[%s172 + $0x318] sm:$0xff] %vm1403, %v1260
      %1504 = vst.msk [vmem:[%s172 + $0x320] sm:$0xff] %vm1403, %v1265
      %1505 = vst.msk [vmem:[%s172 + $0x328] sm:$0xff] %vm1403, %v1270
      %1506 = vst.msk [vmem:[%s172 + $0x330] sm:$0xff] %vm1403, %v1275
      %1507 = vst.msk [vmem:[%s172 + $0x338] sm:$0xff] %vm1403, %v1280
      %1508 = vst.msk [vmem:[%s172 + $0x340] sm:$0xff] %vm1403, %v1285
      %1509 = vst.msk [vmem:[%s172 + $0x348] sm:$0xff] %vm1403, %v1290
      %1510 = vst.msk [vmem:[%s172 + $0x350] sm:$0xff] %vm1403, %v1295
      %1511 = vst.msk [vmem:[%s172 + $0x358] sm:$0xff] %vm1403, %v1300
      %1512 = vst.msk [vmem:[%s172 + $0x360] sm:$0xff] %vm1403, %v1305
      %1513 = vst.msk [vmem:[%s172 + $0x368] sm:$0xff] %vm1403, %v1310
      %1514 = vst.msk [vmem:[%s172 + $0x370] sm:$0xff] %vm1403, %v1315
      %1515 = vst.msk [vmem:[%s172 + $0x378] sm:$0xff] %vm1403, %v1320
      %1516 = vst.msk [vmem:[%s172 + $0x380] sm:$0xff] %vm1403, %v1325
      %1517 = vst.msk [vmem:[%s172 + $0x388] sm:$0xff] %vm1403, %v1330
      %1518 = vst.msk [vmem:[%s172 + $0x390] sm:$0xff] %vm1403, %v1335
      %1519 = vst.msk [vmem:[%s172 + $0x398] sm:$0xff] %vm1403, %v1340
      %1520 = vst.msk [vmem:[%s172 + $0x3a0] sm:$0xff] %vm1403, %v1345
      %1521 = vst.msk [vmem:[%s172 + $0x3a8] sm:$0xff] %vm1403, %v1350
      %1522 = vst.msk [vmem:[%s172 + $0x3b0] sm:$0xff] %vm1403, %v1355
      %1523 = vst.msk [vmem:[%s172 + $0x3b8] sm:$0xff] %vm1403, %v1360
      %1524 = vst.msk [vmem:[%s172 + $0x3c0] sm:$0xff] %vm1403, %v1365
      %1525 = vst.msk [vmem:[%s172 + $0x3c8] sm:$0xff] %vm1403, %v1370
      %1526 = vst.msk [vmem:[%s172 + $0x3d0] sm:$0xff] %vm1403, %v1375
      %1527 = vst.msk [vmem:[%s172 + $0x3d8] sm:$0xff] %vm1403, %v1380
      %1528 = vst.msk [vmem:[%s172 + $0x3e0] sm:$0xff] %vm1403, %v1385
      %1529 = vst.msk [vmem:[%s172 + $0x3e8] sm:$0xff] %vm1403, %v1390
      %1530 = vst.msk [vmem:[%s172 + $0x3f0] sm:$0xff] %vm1403, %v1395
      %1531 = vst.msk [vmem:[%s172 + $0x3f8] sm:$0xff] %vm1403, %v1400
      %s1532 = smul.u32 128, %s14
      %p1533 = scmp.lt.s32.totalorder %s1532, 255
      %s1534 = scalar_select %p1533, %s1532, 255
      %s1535 = smul.addr %s1534, 8
      %s1536 = scalar_lea.vmem %s3, %s1535
      // Predicated region
      $region33: #{tpu_custom_call.1} parent=31 // pred_check
        %p1537 = pneg %p100
      $region34: #{tpu_custom_call.1} parent=31 // pred_check_branch
        %1539 = sbr.rel (%p1537) target = $region36
      $region35: #{tpu_custom_call.1} parent=31 // pred_region
        %s1540 = smul.u32 128, %s14
      $region36: #{tpu_custom_call.1} parent=31 // pred_fallthru
        _
    $region32: #{tpu_custom_call.1} parent=5 // pred_fallthru
      _
    %p1541 = scmp.le.s32.totalorder 2, %s9
    // Predicated region
    $region37: #{tpu_custom_call.1} parent=5 // pred_check
      %p1542 = pneg %p1541
    $region38: #{tpu_custom_call.1} parent=5 // pred_check_branch
      %1544 = sbr.rel (%p1542) target = $region40
    $region39: #{tpu_custom_call.1} parent=5 // pred_region
      %s1545 = ssub.s32 %s9, 2
      // Predicated region
      $region41: #{tpu_custom_call.1} parent=39 // pred_check
        %p1546 = pneg %p106
      $region42: #{tpu_custom_call.1} parent=39 // pred_check_branch
        %1548 = sbr.rel (%p1546) target = $region44
      $region43: #{tpu_custom_call.1} parent=39 // pred_region
        %s1549 = smul.u32 128, %s15
        %p1550 = scmp.lt.s32.totalorder %s1549, 255
        %s1551 = scalar_select %p1550, %s1549, 255
        %s1552 = smul.addr %s1551, 8
        %s1553 = scalar_lea.vmem %s3, %s1552
      $region44: #{tpu_custom_call.1} parent=39 // pred_fallthru
        _
    $region40: #{tpu_custom_call.1} parent=5 // pred_fallthru
      _
  $region6: #{tpu_custom_call.1} parent=0 // loop_footer
    %s13 = sadd.s32 1, %s9
  $region7: #{tpu_custom_call.1} parent=0 // loop_footer_branch
    %8 = sbr.rel target = $region3
  $region8: #{tpu_custom_call.1} parent=0 // loop_exit
    _

</llo_original>
